<compile_context>
chip_gen: v7x
topology: tpu7x:2x2x1
jax: 0.10.0
libtpu: 0.0.40
codegen_flags: <defaults>
</compile_context>

<pallas_src>
import functools

import jax
import jax.numpy as jnp
from jax.experimental import pallas as pl
from jax.experimental.pallas import tpu as pltpu

_LANE = 128
_SUBLANE = 8


def _round_up(v, m):
    return -(-v // m) * m


def _prototypes_kernel(x_ref, w_ref, o_ref, *, compute_dtype):
    # One MXU matmul per point tile: (tm, C) @ (C, P) -> (tm, P), f32 accumulate.
    x = x_ref[...]
    w = w_ref[...]
    if compute_dtype is not None:
        if x.dtype != compute_dtype:
            x = x.astype(compute_dtype)
        if w.dtype != compute_dtype:
            w = w.astype(compute_dtype)
    o_ref[...] = jnp.dot(
        x, w, preferred_element_type=jnp.float32
    ).astype(o_ref.dtype)


def _vmem_budget_bytes():
    """VMEM budget for the pipeline buffers (and the vmem_limit we pass).

    Capped at 48 MiB so the plan fits v7x's 64 MiB physical VMEM with headroom
    for compiler scratch; v5e/v6e (128 MiB physical) use the same cap.
    """
    physical = 128 << 20
    try:
        info = pltpu.get_tpu_info()
        physical = int(getattr(info, "vmem_capacity_bytes", physical))
    except Exception:
        pass
    return int(min(48 << 20, physical * 0.6))


def prototypes_forward(x_feats, weight, *, tm=8192, compute_dtype=None,
                       out_dtype=None, megacore_split_rows=4096):
    """Pallas equivalent of Prototypes.forward(x):  x.F @ W  (no bias).

    x_feats : (N, C) point features (x.F of the sparse tensor).
              Caller contract: store/pass x in bf16 when possible -- that
              halves the dominant x HBM stream; the in-kernel compute_dtype
              cast saves zero HBM bytes and exists only as a fallback.
    weight  : (C, P) prototype weights (1x1 conv kernel, no bias).
    tm      : requested point tile (rows per grid step).  Large tiles
              amortize the ~0.35 us per-step overhead; tm is clamped so the
              double-buffered, lane-padded VMEM footprint stays inside the
              per-chip budget (see _vmem_budget_bytes).
    compute_dtype : optional dtype fed to the MXU.  None (default) keeps the
              input dtype exactly (no silent precision change vs the f32
              reference module); pass jnp.bfloat16 to opt into the
              MXU-native bf16 path (accumulation is always f32).
    out_dtype : output dtype (default = x_feats.dtype).  Passing bf16 halves
              the dominant output HBM stream; note it discards accumulator
              precision at the HBM boundary.
    megacore_split_rows : above this N, always emit >= 2 grid steps so v7x's
              2 TensorCores share the work (harmless on v5e/v6e).
    returns : (N, P) array.
    """
    N, C = x_feats.shape
    C_w, P = weight.shape
    assert C == C_w, "feature channels must match weight rows"
    if out_dtype is None:
        out_dtype = x_feats.dtype

    x_bytes = jnp.dtype(x_feats.dtype).itemsize
    o_bytes = jnp.dtype(out_dtype).itemsize
    w_bytes = jnp.dtype(weight.dtype).itemsize

    # --- VMEM accounting (lane padding of narrow blocks included). ---------
    c_pad = _round_up(C, _LANE)   # (tm, 32) block pads to 128 lanes (~4x raw)
    p_pad = _round_up(P, _LANE)
    budget = _vmem_budget_bytes()
    w_resident = _round_up(C, _SUBLANE) * p_pad * w_bytes
    # Per-row cost: x double-buffered + output double-buffered.
    per_row = 2 * c_pad * x_bytes + 2 * p_pad * o_bytes
    tm_budget = max(_SUBLANE, ((budget - w_resident) // per_row) // _SUBLANE * _SUBLANE)
    tm_eff = min(tm, tm_budget)

    # --- Block sizing / megacore split. -------------------------------------
    if N <= tm_eff:
        if N > megacore_split_rows:
            # Force >= 2 parallel grid steps so both v7x TensorCores get work.
            tm_eff = min(tm_eff, _round_up(pl.cdiv(N, 2), _SUBLANE))
        else:
            # Small-N fast path: a single block covering all points.
            tm_eff = N
    # (8,128) constraint: row tile must be a multiple of 8 unless it equals N.
    if tm_eff != N and tm_eff % _SUBLANE != 0:
        tm_eff = max(_SUBLANE, (tm_eff // _SUBLANE) * _SUBLANE)

    grid = (pl.cdiv(N, tm_eff),)

    # Actual VMEM the plan needs (buffers + resident weight + headroom).
    rows_pad = _round_up(min(tm_eff, _round_up(N, _SUBLANE)), _SUBLANE)
    vmem_needed = (2 * rows_pad * c_pad * x_bytes
                   + 2 * rows_pad * p_pad * o_bytes
                   + w_resident)
    vmem_limit = int(min(max(vmem_needed + (4 << 20), 16 << 20), budget))

    kernel = functools.partial(_prototypes_kernel, compute_dtype=compute_dtype)

    return pl.pallas_call(
        kernel,
        out_shape=jax.ShapeDtypeStruct((N, P), out_dtype),
        grid_spec=pltpu.PrefetchScalarGridSpec(
            num_scalar_prefetch=0,
            grid=grid,
            in_specs=[
                # Tile of points; full channel extent (equals full array dim).
                pl.BlockSpec((tm_eff, C), lambda i: (i, 0)),
                # Full weight matrix, resident across all grid steps.
                pl.BlockSpec((C, P), lambda i: (0, 0)),
            ],
            out_specs=pl.BlockSpec((tm_eff, P), lambda i: (i, 0)),
        ),
        compiler_params=pltpu.CompilerParams(
            dimension_semantics=("parallel",),
            vmem_limit_bytes=vmem_limit,
        ),
    )(x_feats, weight)


if __name__ == "__main__":
    # Module config: Prototypes(output_dim=32, num_prototypes=128).
    output_dim = 32        # input feature channels (C)
    num_prototypes = 128   # output channels / prototype count (P)
    n_points = 256         # number of sparse-tensor points (rows of x.F)

    key = jax.random.PRNGKey(0)
    kx, kw, kx2 = jax.random.split(key, 3)

    x_f32 = jax.random.normal(kx, (n_points, output_dim), dtype=jnp.float32)
    w_f32 = jax.random.normal(kw, (output_dim, num_prototypes), dtype=jnp.float32)
    w_f32 = w_f32 * (2.0 / output_dim) ** 0.5  # kaiming-ish init, no bias

    # --- Case 1: small-N single-block path, exact f32 semantics (default:
    #             no silent downcast). ---------------------------------------
    out1 = prototypes_forward(x_f32, w_f32)
    out1 = jax.block_until_ready(out1)
    ref1 = x_f32 @ w_f32
    assert out1.shape == (n_points, num_prototypes)
    assert jnp.allclose(out1, ref1, atol=1e-4, rtol=1e-4)

    # --- Case 2: tiled path with ragged last tile (N not multiple of tm),
    #             f32 compute for an exact reference check. ------------------
    n2 = 2000
    x2 = jax.random.normal(kx2, (n2, output_dim), dtype=jnp.float32)
    out2 = prototypes_forward(x2, w_f32, tm=512)
    out2 = jax.block_until_ready(out2)
    ref2 = x2 @ w_f32
    assert out2.shape == (n2, num_prototypes)
    assert jnp.allclose(out2, ref2, atol=1e-4, rtol=1e-4)

    # --- Case 3: bf16 storage + opt-in bf16 MXU path, f32 output. -----------
    x_bf16 = x_f32.astype(jnp.bfloat16)
    w_bf16 = w_f32.astype(jnp.bfloat16)
    out3 = prototypes_forward(x_bf16, w_bf16, compute_dtype=jnp.bfloat16,
                              out_dtype=jnp.float32)
    out3 = jax.block_until_ready(out3)
    ref3 = x_bf16.astype(jnp.float32) @ w_bf16.astype(jnp.float32)
    assert out3.shape == (n_points, num_prototypes)
    assert jnp.allclose(out3, ref3, atol=1e-3, rtol=1e-3)

    print("KERNEL_OK")
</pallas_src>

<mosaic_0001>
module attributes {stable_mosaic.version = 11 : i64} {
  func.func @_prototypes_kernel(%arg0: i32, %arg1: memref<256x32xf32, #tpu.memory_space<vmem>>, %arg2: memref<32x128xf32, #tpu.memory_space<vmem>>, %arg3: memref<256x128xf32, #tpu.memory_space<vmem>>) attributes {dimension_semantics = [#tpu.dimension_semantics<parallel>], iteration_bounds = array<i64: 1>, scalar_prefetch = 0 : i64, scratch_operands = 0 : i64, tpu.core_type = #tpu.core_type<tc>, window_params = [{transform_indices = @transform_0, window_bounds = array<i64: 256, 32>}, {pipeline_mode = #tpu.pipeline_mode<synchronous>, transform_indices = @transform_1, window_bounds = array<i64: 32, 128>}, {transform_indices = @transform_2, window_bounds = array<i64: 256, 128>}]} {
    %c0 = arith.constant 0 : index
    %c0_0 = arith.constant 0 : index
    %0 = vector.load %arg1[%c0, %c0_0] : memref<256x32xf32, #tpu.memory_space<vmem>>, vector<256x32xf32>
    %c0_1 = arith.constant 0 : index
    %c0_2 = arith.constant 0 : index
    %1 = vector.load %arg2[%c0_1, %c0_2] : memref<32x128xf32, #tpu.memory_space<vmem>>, vector<32x128xf32>
    %cst = arith.constant dense<0.000000e+00> : vector<256x128xf32>
    %2 = tpu.matmul %0, %1, %cst {dimension_numbers = #tpu.dot_dimension_numbers<[1], [0], [0], [1], [0, 0, 1, 1], [], []>} : vector<256x32xf32>, vector<32x128xf32>, vector<256x128xf32> -> vector<256x128xf32>
    %c0_3 = arith.constant 0 : index
    %c0_4 = arith.constant 0 : index
    %3 = vector.load %arg3[%c0_3, %c0_4] : memref<256x128xf32, #tpu.memory_space<vmem>>, vector<256x128xf32>
    tpu.vector_store %arg3[%c0_3, %c0_4], %2 {strides = array<i32>} : memref<256x128xf32, #tpu.memory_space<vmem>>, vector<256x128xf32>,
    return
  }
  func.func @transform_0(%arg0: i32) -> (i32, i32) {
    %c0_i32 = arith.constant 0 : i32
    %c0_i32_0 = arith.constant 0 : i32
    return %arg0, %c0_i32 : i32, i32
  }
  func.func @transform_1(%arg0: i32) -> (i32, i32) {
    %c0_i32 = arith.constant 0 : i32
    %c0_i32_0 = arith.constant 0 : i32
    %c0_i32_1 = arith.constant 0 : i32
    return %c0_i32, %c0_i32_0 : i32, i32
  }
  func.func @transform_2(%arg0: i32) -> (i32, i32) {
    %c0_i32 = arith.constant 0 : i32
    %c0_i32_0 = arith.constant 0 : i32
    return %arg0, %c0_i32 : i32, i32
  }
}

</mosaic_0001>

<llo_original>
// kernel: tpu_custom_call.1
$region0: #{tpu_custom_call.1}
  #allocation0 [shape = 'u32[]', space=smem, size = 0x4, offset = 0x4, fixed_abs, tag = 'smem constant byte address 0x4 - core index']
  #allocation1 [shape = 'u32[144,128]{1,0:T(1,128)}', space=vmem, size = 0x12000, scoped, tag = 'internal scratch']
  %s0 = inlined_call_operand.vmem [shape: f32[256,32], index: 0, kind: input, shape index: {}]
  %s1 = inlined_call_operand.vmem [shape: f32[32,128], index: 1, kind: input, shape index: {}]
  %s2 = inlined_call_operand.hbm [shape: f32[256,128], index: 2, kind: output, shape index: {}]
  %s3 = sld [smem:[#allocation0]]
  $region18: #{tpu_custom_call.1} parent=0
    _
  %s5 = ssub.s32 1, %s3
  %s6 = scalar_select 0, %s5, %s3
  $region1: #{tpu_custom_call.1} parent=0
    #allocation2 [shape = 'u8[131072]{0}', space=vmem, size = 0x20000, scoped, tag = 'output window, operand 0, single buffered']
    #allocation3 [shape = 's32[1]{0}', space=sflag, size = 0x4, scoped, tag = 'scoped memory for tpu_custom_call.1']
    %7 = vsyncpa [#allocation3], 0
    // Predicated region
    $region2: #{tpu_custom_call.1} parent=1 // pred_check
      _
    $region3: #{tpu_custom_call.1} parent=1 // pred_check_branch
      %9 = sbr.rel (0) target = $region5
    $region4: #{tpu_custom_call.1} parent=1 // pred_region
      _
    $region5: #{tpu_custom_call.1} parent=1 // pred_fallthru
      _
    // Predicated region
    $region6: #{tpu_custom_call.1} parent=1 // pred_check
      _
    $region7: #{tpu_custom_call.1} parent=1 // pred_check_branch
      %11 = sbr.rel (0) target = $region9
    $region8: #{tpu_custom_call.1} parent=1 // pred_region
      _
    $region9: #{tpu_custom_call.1} parent=1 // pred_fallthru
      _
    %v12 = vld [vmem:[%s0] sm:$0xff]
    %v13 = vld [vmem:[%s0 + $0x8] sm:$0xff]
    %v14 = vld [vmem:[%s0 + $0x10] sm:$0xff]
    %v15 = vld [vmem:[%s0 + $0x18] sm:$0xff]
    %v16 = vld [vmem:[%s0 + $0x20] sm:$0xff]
    %v17 = vld [vmem:[%s0 + $0x28] sm:$0xff]
    %v18 = vld [vmem:[%s0 + $0x30] sm:$0xff]
    %v19 = vld [vmem:[%s0 + $0x38] sm:$0xff]
    %v20 = vld [vmem:[%s0 + $0x40] sm:$0xff]
    %v21 = vld [vmem:[%s0 + $0x48] sm:$0xff]
    %v22 = vld [vmem:[%s0 + $0x50] sm:$0xff]
    %v23 = vld [vmem:[%s0 + $0x58] sm:$0xff]
    %v24 = vld [vmem:[%s0 + $0x60] sm:$0xff]
    %v25 = vld [vmem:[%s0 + $0x68] sm:$0xff]
    %v26 = vld [vmem:[%s0 + $0x70] sm:$0xff]
    %v27 = vld [vmem:[%s0 + $0x78] sm:$0xff]
    %v28 = vld [vmem:[%s0 + $0x80] sm:$0xff]
    %v29 = vld [vmem:[%s0 + $0x88] sm:$0xff]
    %v30 = vld [vmem:[%s0 + $0x90] sm:$0xff]
    %v31 = vld [vmem:[%s0 + $0x98] sm:$0xff]
    %v32 = vld [vmem:[%s0 + $0xa0] sm:$0xff]
    %v33 = vld [vmem:[%s0 + $0xa8] sm:$0xff]
    %v34 = vld [vmem:[%s0 + $0xb0] sm:$0xff]
    %v35 = vld [vmem:[%s0 + $0xb8] sm:$0xff]
    %v36 = vld [vmem:[%s0 + $0xc0] sm:$0xff]
    %v37 = vld [vmem:[%s0 + $0xc8] sm:$0xff]
    %v38 = vld [vmem:[%s0 + $0xd0] sm:$0xff]
    %v39 = vld [vmem:[%s0 + $0xd8] sm:$0xff]
    %v40 = vld [vmem:[%s0 + $0xe0] sm:$0xff]
    %v41 = vld [vmem:[%s0 + $0xe8] sm:$0xff]
    %v42 = vld [vmem:[%s0 + $0xf0] sm:$0xff]
    %v43 = vld [vmem:[%s0 + $0xf8] sm:$0xff]
    %v44 = vld [vmem:[%s1] sm:$0xff]
    %v45 = vld [vmem:[%s1 + $0x8] sm:$0xff]
    %v46 = vld [vmem:[%s1 + $0x10] sm:$0xff]
    %v47 = vld [vmem:[%s1 + $0x18] sm:$0xff]
    %vm48 = vcmask 261120
    %v50 = vsel %vm48, %v12, 0
    %v53 = vsel %vm48, %v13, 0
    %v56 = vsel %vm48, %v14, 0
    %v59 = vsel %vm48, %v15, 0
    %v62 = vsel %vm48, %v16, 0
    %v65 = vsel %vm48, %v17, 0
    %v68 = vsel %vm48, %v18, 0
    %v71 = vsel %vm48, %v19, 0
    %v74 = vsel %vm48, %v20, 0
    %v77 = vsel %vm48, %v21, 0
    %v80 = vsel %vm48, %v22, 0
    %v83 = vsel %vm48, %v23, 0
    %v86 = vsel %vm48, %v24, 0
    %v89 = vsel %vm48, %v25, 0
    %v92 = vsel %vm48, %v26, 0
    %v95 = vsel %vm48, %v27, 0
    %v98 = vsel %vm48, %v28, 0
    %v101 = vsel %vm48, %v29, 0
    %v104 = vsel %vm48, %v30, 0
    %v107 = vsel %vm48, %v31, 0
    %v110 = vsel %vm48, %v32, 0
    %v113 = vsel %vm48, %v33, 0
    %v116 = vsel %vm48, %v34, 0
    %v119 = vsel %vm48, %v35, 0
    %v122 = vsel %vm48, %v36, 0
    %v125 = vsel %vm48, %v37, 0
    %v128 = vsel %vm48, %v38, 0
    %v131 = vsel %vm48, %v39, 0
    %v134 = vsel %vm48, %v40, 0
    %v137 = vsel %vm48, %v41, 0
    %v140 = vsel %vm48, %v42, 0
    %v143 = vsel %vm48, %v43, 0
    %145 = vmatprep.subr.mxu0 0.0
    %146 = vmatpush1.msra.mxu0 %v44
    %147 = vmatprep.subr.mxu0 0.0
    %148 = vmatpush1.msra.mxu0 %v45
    %149 = vmatprep.subr.mxu0 0.0
    %150 = vmatpush1.msra.mxu0 %v46
    %151 = vmatprep.subr.mxu0 0.0
    %152 = vmatpush1.msra.mxu0 %v47
    %153 = vmatprep.subr.mxu0 0.0
    %154 = vmatpush1.msra.mxu0 0.0
    %155 = vmatprep.subr.mxu0 0.0
    %156 = vmatpush1.msra.mxu0 0.0
    %157 = vmatprep.subr.mxu0 0.0
    %158 = vmatpush1.msra.mxu0 0.0
    %159 = vmatprep.subr.mxu0 0.0
    %160 = vmatpush1.msra.mxu0 0.0
    %161 = vmatprep.subr.mxu0 0.0
    %162 = vmatpush1.msra.mxu0 0.0
    %163 = vmatprep.subr.mxu0 0.0
    %164 = vmatpush1.msra.mxu0 0.0
    %165 = vmatprep.subr.mxu0 0.0
    %166 = vmatpush1.msra.mxu0 0.0
    %167 = vmatprep.subr.mxu0 0.0
    %168 = vmatpush1.msra.mxu0 0.0
    %169 = vmatprep.subr.mxu0 0.0
    %170 = vmatpush1.msra.mxu0 0.0
    %171 = vmatprep.subr.mxu0 0.0
    %172 = vmatpush1.msra.mxu0 0.0
    %173 = vmatprep.subr.mxu0 0.0
    %174 = vmatpush1.msra.mxu0 0.0
    %175 = vmatprep.subr.mxu0 0.0
    %176 = vmatpush1.msra.mxu0 0.0
    %177 = vmatprep.subr.mxu0 0.0
    %178 = vmatpush1.msra.mxu0 0.0
    %179 = vmatprep.subr.mxu0 0.0
    %180 = vmatpush1.msra.mxu0 0.0
    %181 = vmatprep.subr.mxu0 0.0
    %182 = vmatpush1.msra.mxu0 0.0
    %183 = vmatprep.subr.mxu0 0.0
    %184 = vmatpush1.msra.mxu0 0.0
    %185 = vmatprep.subr.mxu0 0.0
    %186 = vmatpush1.msra.mxu0 0.0
    %187 = vmatprep.subr.mxu0 0.0
    %188 = vmatpush1.msra.mxu0 0.0
    %189 = vmatprep.subr.mxu0 0.0
    %190 = vmatpush1.msra.mxu0 0.0
    %191 = vmatprep.subr.mxu0 0.0
    %192 = vmatpush1.msra.mxu0 0.0
    %193 = vmatprep.subr.mxu0 0.0
    %194 = vmatpush1.msra.mxu0 0.0
    %195 = vmatprep.subr.mxu0 0.0
    %196 = vmatpush1.msra.mxu0 0.0
    %197 = vmatprep.subr.mxu0 0.0
    %198 = vmatpush1.msra.mxu0 0.0
    %199 = vmatprep.subr.mxu0 0.0
    %200 = vmatpush1.msra.mxu0 0.0
    %201 = vmatprep.subr.mxu0 0.0
    %202 = vmatpush1.msra.mxu0 0.0
    %203 = vmatprep.subr.mxu0 0.0
    %204 = vmatpush1.msra.mxu0 0.0
    %205 = vmatprep.subr.mxu0 0.0
    %206 = vmatpush1.msra.mxu0 0.0
    %207 = vmatprep.subr.mxu0 0.0
    %208 = vmatpush1.msra.mxu0 0.0
    %209 = vmatprep.mubr.f32.mxu0 0.0
    %210 = vmatmul.mubr.f32.gmra.mrb[0].mxu0 %v50
    %v211 = vpop.f32.mrb[0].mxu0
    %v212 = vadd.f32 0.0, %v211
    %v213 = vpop.f32.mrb[0].mxu0
    %214 = vmatprep.mubr.f32.mxu0 0.0
    %215 = vmatmul.mubr.f32.gmra.mrb[0].mxu0 %v53
    %v216 = vpop.f32.mrb[0].mxu0
    %v217 = vadd.f32 0.0, %v216
    %v218 = vpop.f32.mrb[0].mxu0
    %219 = vmatprep.mubr.f32.mxu0 0.0
    %220 = vmatmul.mubr.f32.gmra.mrb[0].mxu0 %v56
    %v221 = vpop.f32.mrb[0].mxu0
    %v222 = vadd.f32 0.0, %v221
    %v223 = vpop.f32.mrb[0].mxu0
    %224 = vmatprep.mubr.f32.mxu0 0.0
    %225 = vmatmul.mubr.f32.gmra.mrb[0].mxu0 %v59
    %v226 = vpop.f32.mrb[0].mxu0
    %v227 = vadd.f32 0.0, %v226
    %v228 = vpop.f32.mrb[0].mxu0
    %229 = vmatprep.mubr.f32.mxu0 0.0
    %230 = vmatmul.mubr.f32.gmra.mrb[0].mxu0 %v62
    %v231 = vpop.f32.mrb[0].mxu0
    %v232 = vadd.f32 0.0, %v231
    %v233 = vpop.f32.mrb[0].mxu0
    %234 = vmatprep.mubr.f32.mxu0 0.0
    %235 = vmatmul.mubr.f32.gmra.mrb[0].mxu0 %v65
    %v236 = vpop.f32.mrb[0].mxu0
    %v237 = vadd.f32 0.0, %v236
    %v238 = vpop.f32.mrb[0].mxu0
    %239 = vmatprep.mubr.f32.mxu0 0.0
    %240 = vmatmul.mubr.f32.gmra.mrb[0].mxu0 %v68
    %v241 = vpop.f32.mrb[0].mxu0
    %v242 = vadd.f32 0.0, %v241
    %v243 = vpop.f32.mrb[0].mxu0
    %244 = vmatprep.mubr.f32.mxu0 0.0
    %245 = vmatmul.mubr.f32.gmra.mrb[0].mxu0 %v71
    %v246 = vpop.f32.mrb[0].mxu0
    %v247 = vadd.f32 0.0, %v246
    %v248 = vpop.f32.mrb[0].mxu0
    %249 = vmatprep.mubr.f32.mxu0 0.0
    %250 = vmatmul.mubr.f32.gmra.mrb[0].mxu0 %v74
    %v251 = vpop.f32.mrb[0].mxu0
    %v252 = vadd.f32 0.0, %v251
    %v253 = vpop.f32.mrb[0].mxu0
    %254 = vmatprep.mubr.f32.mxu0 0.0
    %255 = vmatmul.mubr.f32.gmra.mrb[0].mxu0 %v77
    %v256 = vpop.f32.mrb[0].mxu0
    %v257 = vadd.f32 0.0, %v256
    %v258 = vpop.f32.mrb[0].mxu0
    %259 = vmatprep.mubr.f32.mxu0 0.0
    %260 = vmatmul.mubr.f32.gmra.mrb[0].mxu0 %v80
    %v261 = vpop.f32.mrb[0].mxu0
    %v262 = vadd.f32 0.0, %v261
    %v263 = vpop.f32.mrb[0].mxu0
    %264 = vmatprep.mubr.f32.mxu0 0.0
    %265 = vmatmul.mubr.f32.gmra.mrb[0].mxu0 %v83
    %v266 = vpop.f32.mrb[0].mxu0
    %v267 = vadd.f32 0.0, %v266
    %v268 = vpop.f32.mrb[0].mxu0
    %269 = vmatprep.mubr.f32.mxu0 0.0
    %270 = vmatmul.mubr.f32.gmra.mrb[0].mxu0 %v86
    %v271 = vpop.f32.mrb[0].mxu0
    %v272 = vadd.f32 0.0, %v271
    %v273 = vpop.f32.mrb[0].mxu0
    %274 = vmatprep.mubr.f32.mxu0 0.0
    %275 = vmatmul.mubr.f32.gmra.mrb[0].mxu0 %v89
    %v276 = vpop.f32.mrb[0].mxu0
    %v277 = vadd.f32 0.0, %v276
    %v278 = vpop.f32.mrb[0].mxu0
    %279 = vmatprep.mubr.f32.mxu0 0.0
    %280 = vmatmul.mubr.f32.gmra.mrb[0].mxu0 %v92
    %v281 = vpop.f32.mrb[0].mxu0
    %v282 = vadd.f32 0.0, %v281
    %v283 = vpop.f32.mrb[0].mxu0
    %284 = vmatprep.mubr.f32.mxu0 0.0
    %285 = vmatmul.mubr.f32.gmra.mrb[0].mxu0 %v95
    %v286 = vpop.f32.mrb[0].mxu0
    %v287 = vadd.f32 0.0, %v286
    %v288 = vpop.f32.mrb[0].mxu0
    %289 = vmatprep.mubr.f32.mxu0 0.0
    %290 = vmatmul.mubr.f32.gmra.mrb[0].mxu0 %v98
    %v291 = vpop.f32.mrb[0].mxu0
    %v292 = vadd.f32 0.0, %v291
    %v293 = vpop.f32.mrb[0].mxu0
    %294 = vmatprep.mubr.f32.mxu0 0.0
    %295 = vmatmul.mubr.f32.gmra.mrb[0].mxu0 %v101
    %v296 = vpop.f32.mrb[0].mxu0
    %v297 = vadd.f32 0.0, %v296
    %v298 = vpop.f32.mrb[0].mxu0
    %299 = vmatprep.mubr.f32.mxu0 0.0
    %300 = vmatmul.mubr.f32.gmra.mrb[0].mxu0 %v104
    %v301 = vpop.f32.mrb[0].mxu0
    %v302 = vadd.f32 0.0, %v301
    %v303 = vpop.f32.mrb[0].mxu0
    %304 = vmatprep.mubr.f32.mxu0 0.0
    %305 = vmatmul.mubr.f32.gmra.mrb[0].mxu0 %v107
    %v306 = vpop.f32.mrb[0].mxu0
    %v307 = vadd.f32 0.0, %v306
    %v308 = vpop.f32.mrb[0].mxu0
    %309 = vmatprep.mubr.f32.mxu0 0.0
    %310 = vmatmul.mubr.f32.gmra.mrb[0].mxu0 %v110
    %v311 = vpop.f32.mrb[0].mxu0
    %v312 = vadd.f32 0.0, %v311
    %v313 = vpop.f32.mrb[0].mxu0
    %314 = vmatprep.mubr.f32.mxu0 0.0
    %315 = vmatmul.mubr.f32.gmra.mrb[0].mxu0 %v113
    %v316 = vpop.f32.mrb[0].mxu0
    %v317 = vadd.f32 0.0, %v316
    %v318 = vpop.f32.mrb[0].mxu0
    %319 = vmatprep.mubr.f32.mxu0 0.0
    %320 = vmatmul.mubr.f32.gmra.mrb[0].mxu0 %v116
    %v321 = vpop.f32.mrb[0].mxu0
    %v322 = vadd.f32 0.0, %v321
    %v323 = vpop.f32.mrb[0].mxu0
    %324 = vmatprep.mubr.f32.mxu0 0.0
    %325 = vmatmul.mubr.f32.gmra.mrb[0].mxu0 %v119
    %v326 = vpop.f32.mrb[0].mxu0
    %v327 = vadd.f32 0.0, %v326
    %v328 = vpop.f32.mrb[0].mxu0
    %329 = vmatprep.mubr.f32.mxu0 0.0
    %330 = vmatmul.mubr.f32.gmra.mrb[0].mxu0 %v122
    %v331 = vpop.f32.mrb[0].mxu0
    %v332 = vadd.f32 0.0, %v331
    %v333 = vpop.f32.mrb[0].mxu0
    %334 = vmatprep.mubr.f32.mxu0 0.0
    %335 = vmatmul.mubr.f32.gmra.mrb[0].mxu0 %v125
    %v336 = vpop.f32.mrb[0].mxu0
    %v337 = vadd.f32 0.0, %v336
    %v338 = vpop.f32.mrb[0].mxu0
    %339 = vmatprep.mubr.f32.mxu0 0.0
    %340 = vmatmul.mubr.f32.gmra.mrb[0].mxu0 %v128
    %v341 = vpop.f32.mrb[0].mxu0
    %v342 = vadd.f32 0.0, %v341
    %v343 = vpop.f32.mrb[0].mxu0
    %344 = vmatprep.mubr.f32.mxu0 0.0
    %345 = vmatmul.mubr.f32.gmra.mrb[0].mxu0 %v131
    %v346 = vpop.f32.mrb[0].mxu0
    %v347 = vadd.f32 0.0, %v346
    %v348 = vpop.f32.mrb[0].mxu0
    %349 = vmatprep.mubr.f32.mxu0 0.0
    %350 = vmatmul.mubr.f32.gmra.mrb[0].mxu0 %v134
    %v351 = vpop.f32.mrb[0].mxu0
    %v352 = vadd.f32 0.0, %v351
    %v353 = vpop.f32.mrb[0].mxu0
    %354 = vmatprep.mubr.f32.mxu0 0.0
    %355 = vmatmul.mubr.f32.gmra.mrb[0].mxu0 %v137
    %v356 = vpop.f32.mrb[0].mxu0
    %v357 = vadd.f32 0.0, %v356
    %v358 = vpop.f32.mrb[0].mxu0
    %359 = vmatprep.mubr.f32.mxu0 0.0
    %360 = vmatmul.mubr.f32.gmra.mrb[0].mxu0 %v140
    %v361 = vpop.f32.mrb[0].mxu0
    %v362 = vadd.f32 0.0, %v361
    %v363 = vpop.f32.mrb[0].mxu0
    %364 = vmatprep.mubr.f32.mxu0 0.0
    %365 = vmatmul.mubr.f32.gmra.mrb[0].mxu0 %v143
    %v366 = vpop.f32.mrb[0].mxu0
    %v367 = vadd.f32 0.0, %v366
    %v368 = vpop.f32.mrb[0].mxu0
    %369 = vdwg.mxu0
    %370 = vst [vmem:[#allocation2] sm:$0xff] %v212
    %371 = vst [vmem:[#allocation2 + $0x8] sm:$0xff] %v217
    %372 = vst [vmem:[#allocation2 + $0x10] sm:$0xff] %v222
    %373 = vst [vmem:[#allocation2 + $0x18] sm:$0xff] %v227
    %374 = vst [vmem:[#allocation2 + $0x20] sm:$0xff] %v232
    %375 = vst [vmem:[#allocation2 + $0x28] sm:$0xff] %v237
    %376 = vst [vmem:[#allocation2 + $0x30] sm:$0xff] %v242
    %377 = vst [vmem:[#allocation2 + $0x38] sm:$0xff] %v247
    %378 = vst [vmem:[#allocation2 + $0x40] sm:$0xff] %v252
    %379 = vst [vmem:[#allocation2 + $0x48] sm:$0xff] %v257
    %380 = vst [vmem:[#allocation2 + $0x50] sm:$0xff] %v262
    %381 = vst [vmem:[#allocation2 + $0x58] sm:$0xff] %v267
    %382 = vst [vmem:[#allocation2 + $0x60] sm:$0xff] %v272
    %383 = vst [vmem:[#allocation2 + $0x68] sm:$0xff] %v277
    %384 = vst [vmem:[#allocation2 + $0x70] sm:$0xff] %v282
    %385 = vst [vmem:[#allocation2 + $0x78] sm:$0xff] %v287
    %386 = vst [vmem:[#allocation2 + $0x80] sm:$0xff] %v292
    %387 = vst [vmem:[#allocation2 + $0x88] sm:$0xff] %v297
    %388 = vst [vmem:[#allocation2 + $0x90] sm:$0xff] %v302
    %389 = vst [vmem:[#allocation2 + $0x98] sm:$0xff] %v307
    %390 = vst [vmem:[#allocation2 + $0xa0] sm:$0xff] %v312
    %391 = vst [vmem:[#allocation2 + $0xa8] sm:$0xff] %v317
    %392 = vst [vmem:[#allocation2 + $0xb0] sm:$0xff] %v322
    %393 = vst [vmem:[#allocation2 + $0xb8] sm:$0xff] %v327
    %394 = vst [vmem:[#allocation2 + $0xc0] sm:$0xff] %v332
    %395 = vst [vmem:[#allocation2 + $0xc8] sm:$0xff] %v337
    %396 = vst [vmem:[#allocation2 + $0xd0] sm:$0xff] %v342
    %397 = vst [vmem:[#allocation2 + $0xd8] sm:$0xff] %v347
    %398 = vst [vmem:[#allocation2 + $0xe0] sm:$0xff] %v352
    %399 = vst [vmem:[#allocation2 + $0xe8] sm:$0xff] %v357
    %400 = vst [vmem:[#allocation2 + $0xf0] sm:$0xff] %v362
    %401 = vst [vmem:[#allocation2 + $0xf8] sm:$0xff] %v367
    // Predicated region
    $region10: #{tpu_custom_call.1} parent=1 // pred_check
      _
    $region11: #{tpu_custom_call.1} parent=1 // pred_check_branch
      %403 = sbr.rel (0) target = $region13
    $region12: #{tpu_custom_call.1} parent=1 // pred_region
      %s405 = ssub.s32 4096, 4096
      %406 = vsyncadd [#allocation3], %s405
      %s407 = sshll.u32 [#allocation2], 4
      %s408 = int_to_ptr.vmem [resolvable:$true] %s407
      %413 = dma.vmem_to_hbm [thread:$0]  %s408, 4096, %s2, [#allocation3], 128, 128, 8
    $region13: #{tpu_custom_call.1} parent=1 // pred_fallthru
      _
    // Predicated region
    $region14: #{tpu_custom_call.1} parent=1 // pred_check
      _
    $region15: #{tpu_custom_call.1} parent=1 // pred_check_branch
      %415 = sbr.rel (0) target = $region17
    $region16: #{tpu_custom_call.1} parent=1 // pred_region
      %416 = dma.done [#allocation3], 4096
    $region17: #{tpu_custom_call.1} parent=1 // pred_fallthru
      _
    %417 = vsyncpa [#allocation3], 1

</llo_original>
